<compile_context>
chip_gen: v6e
topology: v6e:2x2x1
jax: 0.10.0
libtpu: 0.0.40
codegen_flags: <defaults>
</compile_context>

<pallas_src>
import jax
import jax.numpy as jnp
from jax.experimental import pallas as pl
from jax.experimental.pallas import tpu as pltpu

# SELU constants (match torch.nn.SELU defaults).
_SELU_ALPHA = 1.6732632423543772848170429916717
_SELU_SCALE = 1.0507009873554804934193349852946

_LANE = 128      # lane width (last dim)
_SUBLANE = 8     # f32 sublane width (second-to-last dim)


def _selu(x):
    # f32 on the VPU; exp goes to the EUP slot.  The false branch evaluates
    # alpha*(exp(x)-1) for every element and may produce inf in dead lanes for
    # large positive x — benign: jnp.where only selects, it never feeds
    # arithmetic, so do NOT "fix" this into a slower masked form.
    return _SELU_SCALE * jnp.where(x > 0, x, _SELU_ALPHA * (jnp.exp(x) - 1.0))


def _round_up(n, m):
    return ((n + m - 1) // m) * m


def mlp_d_kernel(x_ref,
                 w1_ref, b1_ref,
                 w2_ref, b2_ref,
                 w3_ref, b3_ref,
                 w4_ref, b4_ref,
                 w5_ref, b5_ref,
                 out_ref):
    """One (TILE_B, K_pad) batch tile through the full 5-layer MLP.

    x / weights are bf16 MXU operands; accumulation, bias add and SELU are
    f32; the output tile is stored bf16 (lane-dense, 128 lanes).
    """

    def dense(h_bf16, w_ref, b_ref):
        return (jnp.dot(h_bf16, w_ref[...],
                        preferred_element_type=jnp.float32)
                + b_ref[...])

    h = _selu(dense(x_ref[...], w1_ref, b1_ref))              # x already bf16
    h = _selu(dense(h.astype(jnp.bfloat16), w2_ref, b2_ref))
    h = _selu(dense(h.astype(jnp.bfloat16), w3_ref, b3_ref))
    h = _selu(dense(h.astype(jnp.bfloat16), w4_ref, b4_ref))
    out_ref[...] = dense(h.astype(jnp.bfloat16),
                         w5_ref, b5_ref).astype(out_ref.dtype)


def init_mlp_d_params(key, input_size, num_chan, hid_dim, out_dim=1,
                      dtype=jnp.float32):
    """Deterministic synthetic parameters; shapes follow the nn.Linear layers.

    Stored as (in_features, out_features) so the kernel computes x @ W + b
    (equivalent to PyTorch's x @ W_pt.T + b).
    """
    in_features = num_chan * input_size * input_size
    dims = [in_features, hid_dim, hid_dim, hid_dim, hid_dim, out_dim]
    params = []
    for i in range(5):
        key, kw, kb = jax.random.split(key, 3)
        bound = 1.0 / jnp.sqrt(dims[i])
        w = jax.random.uniform(kw, (dims[i], dims[i + 1]),
                               minval=-bound, maxval=bound, dtype=dtype)
        b = jax.random.uniform(kb, (1, dims[i + 1]),
                               minval=-bound, maxval=bound, dtype=dtype)
        params.append((w, b))
    return params


def _vmem_capacity_bytes():
    """Physical per-core VMEM, with a conservative (v7x) fallback."""
    try:
        return int(pltpu.get_tpu_info().vmem_capacity_bytes)
    except Exception:
        return 64 << 20


def _tile_vmem_bytes(tile_b, k_pad, out_pad, param_bytes):
    """Estimated VMEM footprint for one pipelined batch tile."""
    # Default pipelining double-buffers every operand, including the
    # constant-index_map weights/biases (counted at their real 2x footprint).
    io = 2 * tile_b * k_pad * 2 + 2 * tile_b * out_pad * 2   # bf16 x / out, x2 bufs
    interm = 8 * tile_b * _LANE * 4                          # f32 intermediates slack
    return 2 * param_bytes + io + interm + (2 << 20)         # + compiler scratch slack


def mlp_d_forward(x_nchw, params, out_dim=1, tile_b_max=512):
    """Pallas-backed equivalent of MLP_D.forward."""
    B = x_nchw.shape[0]
    # inputs.view(inputs.size(0), -1): NCHW row-major flatten (plain JAX glue).
    x = x_nchw.reshape(B, -1)
    in_features = x.shape[1]
    k_pad = _round_up(in_features, _LANE)

    # ---- pad + cast parameters (weights bf16, biases f32) -----------------
    padded = []          # [w1, b1, w2, b2, ...] zero-padded
    param_specs = []
    param_bytes = 0
    prev_pad = k_pad
    for (w, bias) in params:
        k, n = w.shape
        n_pad = _round_up(n, _LANE)           # keep 128, do not pad to 256
        w_p = (jnp.zeros((prev_pad, n_pad), jnp.bfloat16)
               .at[:k, :n].set(w.astype(jnp.bfloat16)))
        b_p = (jnp.zeros((1, n_pad), jnp.float32)
               .at[:, :n].set(bias.astype(jnp.float32)))
        padded.extend([w_p, b_p])
        # Constant index_map -> weights/biases stay resident across grid steps.
        param_specs.append(pl.BlockSpec((prev_pad, n_pad), lambda i: (0, 0)))
        param_specs.append(pl.BlockSpec((1, n_pad), lambda i: (0, 0)))
        param_bytes += prev_pad * n_pad * 2 + n_pad * 4
        prev_pad = n_pad
    out_pad = prev_pad

    # ---- generation-aware batch tile + VMEM sizing -------------------------
    vmem_cap = _vmem_capacity_bytes()
    vmem_usable = int(0.75 * vmem_cap)    # ~48 MiB on v7x, ~96 MiB on v5e/v6e

    b_ceil = _round_up(max(B, 1), _SUBLANE)
    tile_b = _SUBLANE
    cand = _SUBLANE
    while cand <= tile_b_max:
        if _tile_vmem_bytes(cand, k_pad, out_pad, param_bytes) <= vmem_usable:
            tile_b = cand
        cand *= 2
    tile_b = min(tile_b, b_ceil)
    # v7x megacore: guarantee >= 2 grid steps when the batch allows it, so the
    # "parallel" batch axis can shard across both TensorCores.
    if b_ceil >= 2 * _SUBLANE:
        tile_b = min(tile_b, _round_up(pl.cdiv(b_ceil, 2), _SUBLANE))
    tile_b = max(tile_b, _SUBLANE)

    num_steps = pl.cdiv(b_ceil, tile_b)
    b_pad = num_steps * tile_b

    # ---- pad + cast input: bf16 stream halves the dominant HBM read -------
    x_p = (jnp.zeros((b_pad, k_pad), jnp.bfloat16)
           .at[:B, :in_features].set(x.astype(jnp.bfloat16)))

    grid = (num_steps,)
    x_spec = pl.BlockSpec((tile_b, k_pad), lambda i: (i, 0))
    out_spec = pl.BlockSpec((tile_b, out_pad), lambda i: (i, 0))

    # ---- advisory cost estimate (unpadded useful work) ---------------------
    flops = 0
    prev = in_features
    for (w, _) in params:
        flops += 2 * B * prev * w.shape[1]
        prev = w.shape[1]
    hid_dim = params[0][0].shape[1]
    transcendentals = 4 * B * hid_dim
    bytes_accessed = int(
        x_p.size * 2
        + sum(int(p.size) * p.dtype.itemsize for p in padded)
        + b_pad * out_pad * 2)

    needed = _tile_vmem_bytes(tile_b, k_pad, out_pad, param_bytes)
    vmem_limit = int(min(max(needed + (4 << 20), 32 << 20), vmem_usable))
    vmem_limit = max(vmem_limit, 16 << 20)

    out = pl.pallas_call(
        mlp_d_kernel,
        out_shape=jax.ShapeDtypeStruct((b_pad, out_pad), jnp.bfloat16),
        grid=grid,
        in_specs=[x_spec] + param_specs,
        out_specs=out_spec,
        compiler_params=pltpu.CompilerParams(
            dimension_semantics=("parallel",),
            vmem_limit_bytes=vmem_limit),
        cost_estimate=pl.CostEstimate(
            flops=flops,
            transcendentals=transcendentals,
            bytes_accessed=bytes_accessed),
    )(x_p, *padded)

    # output.view(b, out_dim): drop batch/lane padding, return f32.
    return out[:B, :out_dim].astype(jnp.float32)


def mlp_d_reference(x_nchw, params):
    """Pure-JAX f32 reference (matches the PyTorch module semantics)."""
    b = x_nchw.shape[0]
    h = x_nchw.reshape(b, -1).astype(jnp.float32)
    for i, (w, bias) in enumerate(params):
        h = h @ w + bias
        if i < 4:
            h = _selu(h)
    return h


if __name__ == "__main__":
    # Small shapes consistent with the module: batch=2, num_chan=4,
    # input_size=16, hid_dim=32, out_dim=1.
    batch, num_chan, input_size, hid_dim, out_dim = 2, 4, 16, 32, 1

    key = jax.random.PRNGKey(0)
    key_x, key_p = jax.random.split(key)

    x = jax.random.normal(
        key_x, (batch, num_chan, input_size, input_size), dtype=jnp.float32)
    params = init_mlp_d_params(key_p, input_size, num_chan, hid_dim, out_dim)

    out = mlp_d_forward(x, params, out_dim=out_dim)
    out = jax.block_until_ready(out)

    ref = mlp_d_reference(x, params)
    assert out.shape == (batch, out_dim), out.shape
    # MXU operands are bf16 (x, weights) with f32 accumulation and a bf16
    # output store -> compare against the pure-f32 reference with a
    # bf16-appropriate tolerance.
    assert jnp.allclose(out, ref, atol=5e-2, rtol=5e-2), (out, ref)

    print("KERNEL_OK")
</pallas_src>

<mosaic_0001>
module attributes {stable_mosaic.version = 11 : i64} {
  func.func @mlp_d_kernel(%arg0: i32, %arg1: memref<8x1024xbf16, #tpu.memory_space<vmem>>, %arg2: memref<1024x128xbf16, #tpu.memory_space<vmem>>, %arg3: memref<1x128xf32, #tpu.memory_space<vmem>>, %arg4: memref<128x128xbf16, #tpu.memory_space<vmem>>, %arg5: memref<1x128xf32, #tpu.memory_space<vmem>>, %arg6: memref<128x128xbf16, #tpu.memory_space<vmem>>, %arg7: memref<1x128xf32, #tpu.memory_space<vmem>>, %arg8: memref<128x128xbf16, #tpu.memory_space<vmem>>, %arg9: memref<1x128xf32, #tpu.memory_space<vmem>>, %arg10: memref<128x128xbf16, #tpu.memory_space<vmem>>, %arg11: memref<1x128xf32, #tpu.memory_space<vmem>>, %arg12: memref<8x128xbf16, #tpu.memory_space<vmem>>) attributes {dimension_semantics = [#tpu.dimension_semantics<parallel>], iteration_bounds = array<i64: 1>, scalar_prefetch = 0 : i64, scratch_operands = 0 : i64, tpu.core_type = #tpu.core_type<tc>, window_params = [{transform_indices = @transform_0, window_bounds = array<i64: 8, 1024>}, {pipeline_mode = #tpu.pipeline_mode<synchronous>, transform_indices = @transform_1, window_bounds = array<i64: 1024, 128>}, {pipeline_mode = #tpu.pipeline_mode<synchronous>, transform_indices = @transform_2, window_bounds = array<i64: 1, 128>}, {pipeline_mode = #tpu.pipeline_mode<synchronous>, transform_indices = @transform_3, window_bounds = array<i64: 128, 128>}, {pipeline_mode = #tpu.pipeline_mode<synchronous>, transform_indices = @transform_4, window_bounds = array<i64: 1, 128>}, {pipeline_mode = #tpu.pipeline_mode<synchronous>, transform_indices = @transform_5, window_bounds = array<i64: 128, 128>}, {pipeline_mode = #tpu.pipeline_mode<synchronous>, transform_indices = @transform_6, window_bounds = array<i64: 1, 128>}, {pipeline_mode = #tpu.pipeline_mode<synchronous>, transform_indices = @transform_7, window_bounds = array<i64: 128, 128>}, {pipeline_mode = #tpu.pipeline_mode<synchronous>, transform_indices = @transform_8, window_bounds = array<i64: 1, 128>}, {pipeline_mode = #tpu.pipeline_mode<synchronous>, transform_indices = @transform_9, window_bounds = array<i64: 128, 128>}, {pipeline_mode = #tpu.pipeline_mode<synchronous>, transform_indices = @transform_10, window_bounds = array<i64: 1, 128>}, {transform_indices = @transform_11, window_bounds = array<i64: 8, 128>}]} {
    %c0 = arith.constant 0 : index
    %c0_0 = arith.constant 0 : index
    %0 = vector.load %arg1[%c0, %c0_0] : memref<8x1024xbf16, #tpu.memory_space<vmem>>, vector<8x1024xbf16>
    %c0_1 = arith.constant 0 : index
    %c0_2 = arith.constant 0 : index
    %1 = vector.load %arg2[%c0_1, %c0_2] : memref<1024x128xbf16, #tpu.memory_space<vmem>>, vector<1024x128xbf16>
    %cst = arith.constant dense<0.000000e+00> : vector<8x128xf32>
    %2 = tpu.matmul %0, %1, %cst {dimension_numbers = #tpu.dot_dimension_numbers<[1], [0], [0], [1], [0, 0, 1, 1], [], []>} : vector<8x1024xbf16>, vector<1024x128xbf16>, vector<8x128xf32> -> vector<8x128xf32>
    %c0_3 = arith.constant 0 : index
    %c0_4 = arith.constant 0 : index
    %3 = vector.load %arg3[%c0_3, %c0_4] : memref<1x128xf32, #tpu.memory_space<vmem>>, vector<1x128xf32>
    %4 = vector.broadcast %3 : vector<1x128xf32> to vector<8x128xf32>
    %5 = arith.addf %2, %4 : vector<8x128xf32>
    %cst_5 = arith.constant 0.000000e+00 : f32
    %6 = vector.broadcast %cst_5 : f32 to vector<8x128xf32>
    %7 = arith.cmpf ogt, %5, %6 : vector<8x128xf32>
    %8 = math.exp %5 : vector<8x128xf32>
    %cst_6 = arith.constant 1.000000e+00 : f32
    %9 = vector.broadcast %cst_6 : f32 to vector<8x128xf32>
    %10 = arith.subf %8, %9 : vector<8x128xf32>
    %cst_7 = arith.constant 1.67326319 : f32
    %11 = vector.broadcast %cst_7 : f32 to vector<8x128xf32>
    %12 = arith.mulf %11, %10 : vector<8x128xf32>
    %13 = arith.select %7, %5, %12 : vector<8x128xi1>, vector<8x128xf32>
    %cst_8 = arith.constant 1.05070102 : f32
    %14 = vector.broadcast %cst_8 : f32 to vector<8x128xf32>
    %15 = arith.mulf %14, %13 : vector<8x128xf32>
    %16 = arith.truncf %15 : vector<8x128xf32> to vector<8x128xbf16>
    %c0_9 = arith.constant 0 : index
    %c0_10 = arith.constant 0 : index
    %17 = vector.load %arg4[%c0_9, %c0_10] : memref<128x128xbf16, #tpu.memory_space<vmem>>, vector<128x128xbf16>
    %cst_11 = arith.constant dense<0.000000e+00> : vector<8x128xf32>
    %18 = tpu.matmul %16, %17, %cst_11 {dimension_numbers = #tpu.dot_dimension_numbers<[1], [0], [0], [1], [0, 0, 1, 1], [], []>} : vector<8x128xbf16>, vector<128x128xbf16>, vector<8x128xf32> -> vector<8x128xf32>
    %c0_12 = arith.constant 0 : index
    %c0_13 = arith.constant 0 : index
    %19 = vector.load %arg5[%c0_12, %c0_13] : memref<1x128xf32, #tpu.memory_space<vmem>>, vector<1x128xf32>
    %20 = vector.broadcast %19 : vector<1x128xf32> to vector<8x128xf32>
    %21 = arith.addf %18, %20 : vector<8x128xf32>
    %cst_14 = arith.constant 0.000000e+00 : f32
    %22 = vector.broadcast %cst_14 : f32 to vector<8x128xf32>
    %23 = arith.cmpf ogt, %21, %22 : vector<8x128xf32>
    %24 = math.exp %21 : vector<8x128xf32>
    %cst_15 = arith.constant 1.000000e+00 : f32
    %25 = vector.broadcast %cst_15 : f32 to vector<8x128xf32>
    %26 = arith.subf %24, %25 : vector<8x128xf32>
    %cst_16 = arith.constant 1.67326319 : f32
    %27 = vector.broadcast %cst_16 : f32 to vector<8x128xf32>
    %28 = arith.mulf %27, %26 : vector<8x128xf32>
    %29 = arith.select %23, %21, %28 : vector<8x128xi1>, vector<8x128xf32>
    %cst_17 = arith.constant 1.05070102 : f32
    %30 = vector.broadcast %cst_17 : f32 to vector<8x128xf32>
    %31 = arith.mulf %30, %29 : vector<8x128xf32>
    %32 = arith.truncf %31 : vector<8x128xf32> to vector<8x128xbf16>
    %c0_18 = arith.constant 0 : index
    %c0_19 = arith.constant 0 : index
    %33 = vector.load %arg6[%c0_18, %c0_19] : memref<128x128xbf16, #tpu.memory_space<vmem>>, vector<128x128xbf16>
    %cst_20 = arith.constant dense<0.000000e+00> : vector<8x128xf32>
    %34 = tpu.matmul %32, %33, %cst_20 {dimension_numbers = #tpu.dot_dimension_numbers<[1], [0], [0], [1], [0, 0, 1, 1], [], []>} : vector<8x128xbf16>, vector<128x128xbf16>, vector<8x128xf32> -> vector<8x128xf32>
    %c0_21 = arith.constant 0 : index
    %c0_22 = arith.constant 0 : index
    %35 = vector.load %arg7[%c0_21, %c0_22] : memref<1x128xf32, #tpu.memory_space<vmem>>, vector<1x128xf32>
    %36 = vector.broadcast %35 : vector<1x128xf32> to vector<8x128xf32>
    %37 = arith.addf %34, %36 : vector<8x128xf32>
    %cst_23 = arith.constant 0.000000e+00 : f32
    %38 = vector.broadcast %cst_23 : f32 to vector<8x128xf32>
    %39 = arith.cmpf ogt, %37, %38 : vector<8x128xf32>
    %40 = math.exp %37 : vector<8x128xf32>
    %cst_24 = arith.constant 1.000000e+00 : f32
    %41 = vector.broadcast %cst_24 : f32 to vector<8x128xf32>
    %42 = arith.subf %40, %41 : vector<8x128xf32>
    %cst_25 = arith.constant 1.67326319 : f32
    %43 = vector.broadcast %cst_25 : f32 to vector<8x128xf32>
    %44 = arith.mulf %43, %42 : vector<8x128xf32>
    %45 = arith.select %39, %37, %44 : vector<8x128xi1>, vector<8x128xf32>
    %cst_26 = arith.constant 1.05070102 : f32
    %46 = vector.broadcast %cst_26 : f32 to vector<8x128xf32>
    %47 = arith.mulf %46, %45 : vector<8x128xf32>
    %48 = arith.truncf %47 : vector<8x128xf32> to vector<8x128xbf16>
    %c0_27 = arith.constant 0 : index
    %c0_28 = arith.constant 0 : index
    %49 = vector.load %arg8[%c0_27, %c0_28] : memref<128x128xbf16, #tpu.memory_space<vmem>>, vector<128x128xbf16>
    %cst_29 = arith.constant dense<0.000000e+00> : vector<8x128xf32>
    %50 = tpu.matmul %48, %49, %cst_29 {dimension_numbers = #tpu.dot_dimension_numbers<[1], [0], [0], [1], [0, 0, 1, 1], [], []>} : vector<8x128xbf16>, vector<128x128xbf16>, vector<8x128xf32> -> vector<8x128xf32>
    %c0_30 = arith.constant 0 : index
    %c0_31 = arith.constant 0 : index
    %51 = vector.load %arg9[%c0_30, %c0_31] : memref<1x128xf32, #tpu.memory_space<vmem>>, vector<1x128xf32>
    %52 = vector.broadcast %51 : vector<1x128xf32> to vector<8x128xf32>
    %53 = arith.addf %50, %52 : vector<8x128xf32>
    %cst_32 = arith.constant 0.000000e+00 : f32
    %54 = vector.broadcast %cst_32 : f32 to vector<8x128xf32>
    %55 = arith.cmpf ogt, %53, %54 : vector<8x128xf32>
    %56 = math.exp %53 : vector<8x128xf32>
    %cst_33 = arith.constant 1.000000e+00 : f32
    %57 = vector.broadcast %cst_33 : f32 to vector<8x128xf32>
    %58 = arith.subf %56, %57 : vector<8x128xf32>
    %cst_34 = arith.constant 1.67326319 : f32
    %59 = vector.broadcast %cst_34 : f32 to vector<8x128xf32>
    %60 = arith.mulf %59, %58 : vector<8x128xf32>
    %61 = arith.select %55, %53, %60 : vector<8x128xi1>, vector<8x128xf32>
    %cst_35 = arith.constant 1.05070102 : f32
    %62 = vector.broadcast %cst_35 : f32 to vector<8x128xf32>
    %63 = arith.mulf %62, %61 : vector<8x128xf32>
    %64 = arith.truncf %63 : vector<8x128xf32> to vector<8x128xbf16>
    %c0_36 = arith.constant 0 : index
    %c0_37 = arith.constant 0 : index
    %65 = vector.load %arg10[%c0_36, %c0_37] : memref<128x128xbf16, #tpu.memory_space<vmem>>, vector<128x128xbf16>
    %cst_38 = arith.constant dense<0.000000e+00> : vector<8x128xf32>
    %66 = tpu.matmul %64, %65, %cst_38 {dimension_numbers = #tpu.dot_dimension_numbers<[1], [0], [0], [1], [0, 0, 1, 1], [], []>} : vector<8x128xbf16>, vector<128x128xbf16>, vector<8x128xf32> -> vector<8x128xf32>
    %c0_39 = arith.constant 0 : index
    %c0_40 = arith.constant 0 : index
    %67 = vector.load %arg11[%c0_39, %c0_40] : memref<1x128xf32, #tpu.memory_space<vmem>>, vector<1x128xf32>
    %68 = vector.broadcast %67 : vector<1x128xf32> to vector<8x128xf32>
    %69 = arith.addf %66, %68 : vector<8x128xf32>
    %70 = arith.truncf %69 : vector<8x128xf32> to vector<8x128xbf16>
    %c0_41 = arith.constant 0 : index
    %c0_42 = arith.constant 0 : index
    %71 = vector.load %arg12[%c0_41, %c0_42] : memref<8x128xbf16, #tpu.memory_space<vmem>>, vector<8x128xbf16>
    tpu.vector_store %arg12[%c0_41, %c0_42], %70 {strides = array<i32>} : memref<8x128xbf16, #tpu.memory_space<vmem>>, vector<8x128xbf16>,
    return
  }
  func.func @transform_0(%arg0: i32) -> (i32, i32) {
    %c0_i32 = arith.constant 0 : i32
    %c0_i32_0 = arith.constant 0 : i32
    return %arg0, %c0_i32 : i32, i32
  }
  func.func @transform_1(%arg0: i32) -> (i32, i32) {
    %c0_i32 = arith.constant 0 : i32
    %c0_i32_0 = arith.constant 0 : i32
    %c0_i32_1 = arith.constant 0 : i32
    return %c0_i32, %c0_i32_0 : i32, i32
  }
  func.func @transform_2(%arg0: i32) -> (i32, i32) {
    %c0_i32 = arith.constant 0 : i32
    %c0_i32_0 = arith.constant 0 : i32
    %c0_i32_1 = arith.constant 0 : i32
    return %c0_i32, %c0_i32_0 : i32, i32
  }
  func.func @transform_3(%arg0: i32) -> (i32, i32) {
    %c0_i32 = arith.constant 0 : i32
    %c0_i32_0 = arith.constant 0 : i32
    %c0_i32_1 = arith.constant 0 : i32
    return %c0_i32, %c0_i32_0 : i32, i32
  }
  func.func @transform_4(%arg0: i32) -> (i32, i32) {
    %c0_i32 = arith.constant 0 : i32
    %c0_i32_0 = arith.constant 0 : i32
    %c0_i32_1 = arith.constant 0 : i32
    return %c0_i32, %c0_i32_0 : i32, i32
  }
  func.func @transform_5(%arg0: i32) -> (i32, i32) {
    %c0_i32 = arith.constant 0 : i32
    %c0_i32_0 = arith.constant 0 : i32
    %c0_i32_1 = arith.constant 0 : i32
    return %c0_i32, %c0_i32_0 : i32, i32
  }
  func.func @transform_6(%arg0: i32) -> (i32, i32) {
    %c0_i32 = arith.constant 0 : i32
    %c0_i32_0 = arith.constant 0 : i32
    %c0_i32_1 = arith.constant 0 : i32
    return %c0_i32, %c0_i32_0 : i32, i32
  }
  func.func @transform_7(%arg0: i32) -> (i32, i32) {
    %c0_i32 = arith.constant 0 : i32
    %c0_i32_0 = arith.constant 0 : i32
    %c0_i32_1 = arith.constant 0 : i32
    return %c0_i32, %c0_i32_0 : i32, i32
  }
  func.func @transform_8(%arg0: i32) -> (i32, i32) {
    %c0_i32 = arith.constant 0 : i32
    %c0_i32_0 = arith.constant 0 : i32
    %c0_i32_1 = arith.constant 0 : i32
    return %c0_i32, %c0_i32_0 : i32, i32
  }
  func.func @transform_9(%arg0: i32) -> (i32, i32) {
    %c0_i32 = arith.constant 0 : i32
    %c0_i32_0 = arith.constant 0 : i32
    %c0_i32_1 = arith.constant 0 : i32
    return %c0_i32, %c0_i32_0 : i32, i32
  }
  func.func @transform_10(%arg0: i32) -> (i32, i32) {
    %c0_i32 = arith.constant 0 : i32
    %c0_i32_0 = arith.constant 0 : i32
    %c0_i32_1 = arith.constant 0 : i32
    return %c0_i32, %c0_i32_0 : i32, i32
  }
  func.func @transform_11(%arg0: i32) -> (i32, i32) {
    %c0_i32 = arith.constant 0 : i32
    %c0_i32_0 = arith.constant 0 : i32
    return %arg0, %c0_i32 : i32, i32
  }
}

</mosaic_0001>

<llo_original>
// kernel: tpu_custom_call.1
$region0: #{tpu_custom_call.1}
  #allocation0 [shape = 'u32[]', space=smem, size = 0x4, offset = 0x4, fixed_abs, tag = 'smem constant byte address 0x4 - core index']
  #allocation1 [shape = 'u32[144,128]{1,0:T(1,128)}', space=vmem, size = 0x12000, scoped, tag = 'internal scratch']
  %s0 = inlined_call_operand.hbm [shape: bf16[8,1024], index: 0, kind: input, shape index: {}]
  %s1 = inlined_call_operand.hbm [shape: bf16[1024,128], index: 1, kind: input, shape index: {}]
  %s2 = inlined_call_operand.vmem [shape: f32[1,128], index: 2, kind: input, shape index: {}]
  %s3 = inlined_call_operand.hbm [shape: bf16[128,128], index: 3, kind: input, shape index: {}]
  %s4 = inlined_call_operand.vmem [shape: f32[1,128], index: 4, kind: input, shape index: {}]
  %s5 = inlined_call_operand.hbm [shape: bf16[128,128], index: 5, kind: input, shape index: {}]
  %s6 = inlined_call_operand.vmem [shape: f32[1,128], index: 6, kind: input, shape index: {}]
  %s7 = inlined_call_operand.hbm [shape: bf16[128,128], index: 7, kind: input, shape index: {}]
  %s8 = inlined_call_operand.vmem [shape: f32[1,128], index: 8, kind: input, shape index: {}]
  %s9 = inlined_call_operand.hbm [shape: bf16[128,128], index: 9, kind: input, shape index: {}]
  %s10 = inlined_call_operand.vmem [shape: f32[1,128], index: 10, kind: input, shape index: {}]
  %s11 = inlined_call_operand.hbm [shape: bf16[8,128], index: 11, kind: output, shape index: {}]
  %s12 = sld [smem:[#allocation0]]
  $region78: #{tpu_custom_call.1} parent=0
    _
  %s14 = ssub.s32 1, %s12
  %s15 = scalar_select 0, %s14, %s12
  $region1: #{tpu_custom_call.1} parent=0
    #allocation2 [shape = 'u8[16384]{0}', space=vmem, size = 0x4000, scoped, tag = 'input window, operand 0, single buffered']
    #allocation3 [shape = 's32[1]{0}', space=sflag, size = 0x4, scoped, tag = 'scoped memory for tpu_custom_call.1']
    #allocation4 [shape = 's32[1]{0}', space=sflag, size = 0x4, scoped, tag = 'scoped memory for tpu_custom_call.1']
    #allocation5 [shape = 'u8[262144]{0}', space=vmem, size = 0x40000, scoped, tag = 'input window, operand 1, single buffered']
    #allocation6 [shape = 's32[1]{0}', space=sflag, size = 0x4, scoped, tag = 'scoped memory for tpu_custom_call.1']
    #allocation7 [shape = 'u8[32768]{0}', space=vmem, size = 0x8000, scoped, tag = 'input window, operand 3, single buffered']
    #allocation8 [shape = 'u8[32768]{0}', space=vmem, size = 0x8000, scoped, tag = 'input window, operand 5, single buffered']
    #allocation9 [shape = 's32[1]{0}', space=sflag, size = 0x4, scoped, tag = 'scoped memory for tpu_custom_call.1']
    #allocation10 [shape = 'u8[32768]{0}', space=vmem, size = 0x8000, scoped, tag = 'input window, operand 7, single buffered']
    #allocation11 [shape = 'u8[32768]{0}', space=vmem, size = 0x8000, scoped, tag = 'input window, operand 9, single buffered']
    #allocation12 [shape = 's32[1]{0}', space=sflag, size = 0x4, scoped, tag = 'scoped memory for tpu_custom_call.1']
    #allocation13 [shape = 'u8[2048]{0}', space=vmem, size = 0x800, scoped, tag = 'output window, operand 0, single buffered']
    %16 = vsyncpa [#allocation3], 0
    %17 = vsyncpa [#allocation6], 0
    %18 = vsyncpa [#allocation9], 0
    %19 = vsyncpa [#allocation12], 0
    %20 = vsyncpa [#allocation4], 0
    // Predicated region
    $region2: #{tpu_custom_call.1} parent=1 // pred_check
      _
    $region3: #{tpu_custom_call.1} parent=1 // pred_check_branch
      %22 = sbr.rel (0) target = $region5
    $region4: #{tpu_custom_call.1} parent=1 // pred_region
      %s24 = ssub.s32 512, 512
      %25 = vsyncadd [#allocation3], %s24
      %s27 = sshll.u32 [#allocation2], 4
      %s28 = int_to_ptr.vmem [resolvable:$true] %s27
      %30 = dma.hbm_to_vmem [thread:$0]  %s0, 512, %s28, [#allocation3]
    $region5: #{tpu_custom_call.1} parent=1 // pred_fallthru
      _
    // Predicated region
    $region6: #{tpu_custom_call.1} parent=1 // pred_check
      _
    $region7: #{tpu_custom_call.1} parent=1 // pred_check_branch
      %32 = sbr.rel (0) target = $region9
    $region8: #{tpu_custom_call.1} parent=1 // pred_region
      %s34 = ssub.s32 8192, 8192
      %35 = vsyncadd [#allocation6], %s34
      %s36 = sshll.u32 [#allocation5], 4
      %s37 = int_to_ptr.vmem [resolvable:$true] %s36
      %42 = dma.hbm_to_vmem [thread:$0]  %s1, 8192, %s37, [#allocation6], 64, 64, 4
    $region9: #{tpu_custom_call.1} parent=1 // pred_fallthru
      _
    // Predicated region
    $region10: #{tpu_custom_call.1} parent=1 // pred_check
      _
    $region11: #{tpu_custom_call.1} parent=1 // pred_check_branch
      %44 = sbr.rel (0) target = $region13
    $region12: #{tpu_custom_call.1} parent=1 // pred_region
      _
    $region13: #{tpu_custom_call.1} parent=1 // pred_fallthru
      _
    // Predicated region
    $region14: #{tpu_custom_call.1} parent=1 // pred_check
      _
    $region15: #{tpu_custom_call.1} parent=1 // pred_check_branch
      %46 = sbr.rel (0) target = $region17
    $region16: #{tpu_custom_call.1} parent=1 // pred_region
      %s48 = ssub.s32 1024, 1024
      %49 = vsyncadd [#allocation6], %s48
      %s50 = sshll.u32 [#allocation7], 4
      %s51 = int_to_ptr.vmem [resolvable:$true] %s50
      %56 = dma.hbm_to_vmem [thread:$0]  %s3, 1024, %s51, [#allocation6], 64, 64, 4
    $region17: #{tpu_custom_call.1} parent=1 // pred_fallthru
      _
    // Predicated region
    $region18: #{tpu_custom_call.1} parent=1 // pred_check
      _
    $region19: #{tpu_custom_call.1} parent=1 // pred_check_branch
      %58 = sbr.rel (0) target = $region21
    $region20: #{tpu_custom_call.1} parent=1 // pred_region
      _
    $region21: #{tpu_custom_call.1} parent=1 // pred_fallthru
      _
    // Predicated region
    $region22: #{tpu_custom_call.1} parent=1 // pred_check
      _
    $region23: #{tpu_custom_call.1} parent=1 // pred_check_branch
      %60 = sbr.rel (0) target = $region25
    $region24: #{tpu_custom_call.1} parent=1 // pred_region
      %s62 = ssub.s32 1024, 1024
      %63 = vsyncadd [#allocation9], %s62
      %s64 = sshll.u32 [#allocation8], 4
      %s65 = int_to_ptr.vmem [resolvable:$true] %s64
      %70 = dma.hbm_to_vmem [thread:$0]  %s5, 1024, %s65, [#allocation9], 64, 64, 4
    $region25: #{tpu_custom_call.1} parent=1 // pred_fallthru
      _
    // Predicated region
    $region26: #{tpu_custom_call.1} parent=1 // pred_check
      _
    $region27: #{tpu_custom_call.1} parent=1 // pred_check_branch
      %72 = sbr.rel (0) target = $region29
    $region28: #{tpu_custom_call.1} parent=1 // pred_region
      _
    $region29: #{tpu_custom_call.1} parent=1 // pred_fallthru
      _
    // Predicated region
    $region30: #{tpu_custom_call.1} parent=1 // pred_check
      _
    $region31: #{tpu_custom_call.1} parent=1 // pred_check_branch
      %74 = sbr.rel (0) target = $region33
    $region32: #{tpu_custom_call.1} parent=1 // pred_region
      %s76 = ssub.s32 1024, 1024
      %77 = vsyncadd [#allocation9], %s76
      %s78 = sshll.u32 [#allocation10], 4
      %s79 = int_to_ptr.vmem [resolvable:$true] %s78
      %84 = dma.hbm_to_vmem [thread:$0]  %s7, 1024, %s79, [#allocation9], 64, 64, 4
    $region33: #{tpu_custom_call.1} parent=1 // pred_fallthru
      _
    // Predicated region
    $region34: #{tpu_custom_call.1} parent=1 // pred_check
      _
    $region35: #{tpu_custom_call.1} parent=1 // pred_check_branch
      %86 = sbr.rel (0) target = $region37
    $region36: #{tpu_custom_call.1} parent=1 // pred_region
      _
    $region37: #{tpu_custom_call.1} parent=1 // pred_fallthru
      _
    // Predicated region
    $region38: #{tpu_custom_call.1} parent=1 // pred_check
      _
    $region39: #{tpu_custom_call.1} parent=1 // pred_check_branch
      %88 = sbr.rel (0) target = $region41
    $region40: #{tpu_custom_call.1} parent=1 // pred_region
      %s90 = ssub.s32 1024, 1024
      %91 = vsyncadd [#allocation12], %s90
      %s92 = sshll.u32 [#allocation11], 4
      %s93 = int_to_ptr.vmem [resolvable:$true] %s92
      %98 = dma.hbm_to_vmem [thread:$0]  %s9, 1024, %s93, [#allocation12], 64, 64, 4
    $region41: #{tpu_custom_call.1} parent=1 // pred_fallthru
      _
    // Predicated region
    $region42: #{tpu_custom_call.1} parent=1 // pred_check
      _
    $region43: #{tpu_custom_call.1} parent=1 // pred_check_branch
      %100 = sbr.rel (0) target = $region45
    $region44: #{tpu_custom_call.1} parent=1 // pred_region
      _
    $region45: #{tpu_custom_call.1} parent=1 // pred_fallthru
      _
    // Predicated region
    $region46: #{tpu_custom_call.1} parent=1 // pred_check
      _
    $region47: #{tpu_custom_call.1} parent=1 // pred_check_branch
      %102 = sbr.rel (0) target = $region49
    $region48: #{tpu_custom_call.1} parent=1 // pred_region
      %103 = dma.done [#allocation3], 512
    $region49: #{tpu_custom_call.1} parent=1 // pred_fallthru
      _
    // Predicated region
    $region50: #{tpu_custom_call.1} parent=1 // pred_check
      _
    $region51: #{tpu_custom_call.1} parent=1 // pred_check_branch
      %105 = sbr.rel (0) target = $region53
    $region52: #{tpu_custom_call.1} parent=1 // pred_region
      %106 = dma.done [#allocation6], 8192
    $region53: #{tpu_custom_call.1} parent=1 // pred_fallthru
      _
    // Predicated region
    $region54: #{tpu_custom_call.1} parent=1 // pred_check
      _
    $region55: #{tpu_custom_call.1} parent=1 // pred_check_branch
      %108 = sbr.rel (0) target = $region57
    $region56: #{tpu_custom_call.1} parent=1 // pred_region
      %109 = dma.done [#allocation6], 1024
    $region57: #{tpu_custom_call.1} parent=1 // pred_fallthru
      _
    // Predicated region
    $region58: #{tpu_custom_call.1} parent=1 // pred_check
      _
    $region59: #{tpu_custom_call.1} parent=1 // pred_check_branch
      %111 = sbr.rel (0) target = $region61
    $region60: #{tpu_custom_call.1} parent=1 // pred_region
      %112 = dma.done [#allocation9], 1024
    $region61: #{tpu_custom_call.1} parent=1 // pred_fallthru
      _
    // Predicated region
    $region62: #{tpu_custom_call.1} parent=1 // pred_check
      _
    $region63: #{tpu_custom_call.1} parent=1 // pred_check_branch
      %114 = sbr.rel (0) target = $region65
    $region64: #{tpu_custom_call.1} parent=1 // pred_region
      %115 = dma.done [#allocation9], 1024
    $region65: #{tpu_custom_call.1} parent=1 // pred_fallthru
      _
    // Predicated region
    $region66: #{tpu_custom_call.1} parent=1 // pred_check
      _
    $region67: #{tpu_custom_call.1} parent=1 // pred_check_branch
      %117 = sbr.rel (0) target = $region69
    $region68: #{tpu_custom_call.1} parent=1 // pred_region
      %118 = dma.done [#allocation12], 1024
    $region69: #{tpu_custom_call.1} parent=1 // pred_fallthru
      _
    %v120 = vld [vmem:[#allocation2] sm:$0xff]
    %v121 = vld [vmem:[#allocation2 + $0x8] sm:$0xff]
    %v122 = vld [vmem:[#allocation2 + $0x10] sm:$0xff]
    %v123 = vld [vmem:[#allocation2 + $0x18] sm:$0xff]
    %v124 = vld [vmem:[#allocation5] sm:$0xf]
    %v125 = vld [vmem:[#allocation5 + $0x4] sm:$0xf]
    %v126 = vld [vmem:[#allocation5 + $0x8] sm:$0xf]
    %v127 = vld [vmem:[#allocation5 + $0xc] sm:$0xf]
    %v128 = vld [vmem:[#allocation5 + $0x10] sm:$0xf]
    %v129 = vld [vmem:[#allocation5 + $0x14] sm:$0xf]
    %v130 = vld [vmem:[#allocation5 + $0x18] sm:$0xf]
    %v131 = vld [vmem:[#allocation5 + $0x1c] sm:$0xf]
    %v132 = vld [vmem:[#allocation5 + $0x20] sm:$0xf]
    %v133 = vld [vmem:[#allocation5 + $0x24] sm:$0xf]
    %v134 = vld [vmem:[#allocation5 + $0x28] sm:$0xf]
    %v135 = vld [vmem:[#allocation5 + $0x2c] sm:$0xf]
    %v136 = vld [vmem:[#allocation5 + $0x30] sm:$0xf]
    %v137 = vld [vmem:[#allocation5 + $0x34] sm:$0xf]
    %v138 = vld [vmem:[#allocation5 + $0x38] sm:$0xf]
    %v139 = vld [vmem:[#allocation5 + $0x3c] sm:$0xf]
    %v140 = vld [vmem:[#allocation5 + $0x40] sm:$0xf]
    %v141 = vld [vmem:[#allocation5 + $0x44] sm:$0xf]
    %v142 = vld [vmem:[#allocation5 + $0x48] sm:$0xf]
    %v143 = vld [vmem:[#allocation5 + $0x4c] sm:$0xf]
    %v144 = vld [vmem:[#allocation5 + $0x50] sm:$0xf]
    %v145 = vld [vmem:[#allocation5 + $0x54] sm:$0xf]
    %v146 = vld [vmem:[#allocation5 + $0x58] sm:$0xf]
    %v147 = vld [vmem:[#allocation5 + $0x5c] sm:$0xf]
    %v148 = vld [vmem:[#allocation5 + $0x60] sm:$0xf]
    %v149 = vld [vmem:[#allocation5 + $0x64] sm:$0xf]
    %v150 = vld [vmem:[#allocation5 + $0x68] sm:$0xf]
    %v151 = vld [vmem:[#allocation5 + $0x6c] sm:$0xf]
    %v152 = vld [vmem:[#allocation5 + $0x70] sm:$0xf]
    %v153 = vld [vmem:[#allocation5 + $0x74] sm:$0xf]
    %v154 = vld [vmem:[#allocation5 + $0x78] sm:$0xf]
    %v155 = vld [vmem:[#allocation5 + $0x7c] sm:$0xf]
    %v156 = vld [vmem:[#allocation5 + $0x80] sm:$0xf]
    %v157 = vld [vmem:[#allocation5 + $0x84] sm:$0xf]
    %v158 = vld [vmem:[#allocation5 + $0x88] sm:$0xf]
    %v159 = vld [vmem:[#allocation5 + $0x8c] sm:$0xf]
    %v160 = vld [vmem:[#allocation5 + $0x90] sm:$0xf]
    %v161 = vld [vmem:[#allocation5 + $0x94] sm:$0xf]
    %v162 = vld [vmem:[#allocation5 + $0x98] sm:$0xf]
    %v163 = vld [vmem:[#allocation5 + $0x9c] sm:$0xf]
    %v164 = vld [vmem:[#allocation5 + $0xa0] sm:$0xf]
    %v165 = vld [vmem:[#allocation5 + $0xa4] sm:$0xf]
    %v166 = vld [vmem:[#allocation5 + $0xa8] sm:$0xf]
    %v167 = vld [vmem:[#allocation5 + $0xac] sm:$0xf]
    %v168 = vld [vmem:[#allocation5 + $0xb0] sm:$0xf]
    %v169 = vld [vmem:[#allocation5 + $0xb4] sm:$0xf]
    %v170 = vld [vmem:[#allocation5 + $0xb8] sm:$0xf]
    %v171 = vld [vmem:[#allocation5 + $0xbc] sm:$0xf]
    %v172 = vld [vmem:[#allocation5 + $0xc0] sm:$0xf]
    %v173 = vld [vmem:[#allocation5 + $0xc4] sm:$0xf]
    %v174 = vld [vmem:[#allocation5 + $0xc8] sm:$0xf]
    %v175 = vld [vmem:[#allocation5 + $0xcc] sm:$0xf]
    %v176 = vld [vmem:[#allocation5 + $0xd0] sm:$0xf]
    %v177 = vld [vmem:[#allocation5 + $0xd4] sm:$0xf]
    %v178 = vld [vmem:[#allocation5 + $0xd8] sm:$0xf]
    %v179 = vld [vmem:[#allocation5 + $0xdc] sm:$0xf]
    %v180 = vld [vmem:[#allocation5 + $0xe0] sm:$0xf]
    %v181 = vld [vmem:[#allocation5 + $0xe4] sm:$0xf]
    %v182 = vld [vmem:[#allocation5 + $0xe8] sm:$0xf]
    %v183 = vld [vmem:[#allocation5 + $0xec] sm:$0xf]
    %v184 = vld [vmem:[#allocation5 + $0xf0] sm:$0xf]
    %v185 = vld [vmem:[#allocation5 + $0xf4] sm:$0xf]
    %v186 = vld [vmem:[#allocation5 + $0xf8] sm:$0xf]
    %v187 = vld [vmem:[#allocation5 + $0xfc] sm:$0xf]
    %v188 = vld [vmem:[#allocation5 + $0x100] sm:$0xf]
    %v189 = vld [vmem:[#allocation5 + $0x104] sm:$0xf]
    %v190 = vld [vmem:[#allocation5 + $0x108] sm:$0xf]
    %v191 = vld [vmem:[#allocation5 + $0x10c] sm:$0xf]
    %v192 = vld [vmem:[#allocation5 + $0x110] sm:$0xf]
    %v193 = vld [vmem:[#allocation5 + $0x114] sm:$0xf]
    %v194 = vld [vmem:[#allocation5 + $0x118] sm:$0xf]
    %v195 = vld [vmem:[#allocation5 + $0x11c] sm:$0xf]
    %v196 = vld [vmem:[#allocation5 + $0x120] sm:$0xf]
    %v197 = vld [vmem:[#allocation5 + $0x124] sm:$0xf]
    %v198 = vld [vmem:[#allocation5 + $0x128] sm:$0xf]
    %v199 = vld [vmem:[#allocation5 + $0x12c] sm:$0xf]
    %v200 = vld [vmem:[#allocation5 + $0x130] sm:$0xf]
    %v201 = vld [vmem:[#allocation5 + $0x134] sm:$0xf]
    %v202 = vld [vmem:[#allocation5 + $0x138] sm:$0xf]
    %v203 = vld [vmem:[#allocation5 + $0x13c] sm:$0xf]
    %v204 = vld [vmem:[#allocation5 + $0x140] sm:$0xf]
    %v205 = vld [vmem:[#allocation5 + $0x144] sm:$0xf]
    %v206 = vld [vmem:[#allocation5 + $0x148] sm:$0xf]
    %v207 = vld [vmem:[#allocation5 + $0x14c] sm:$0xf]
    %v208 = vld [vmem:[#allocation5 + $0x150] sm:$0xf]
    %v209 = vld [vmem:[#allocation5 + $0x154] sm:$0xf]
    %v210 = vld [vmem:[#allocation5 + $0x158] sm:$0xf]
    %v211 = vld [vmem:[#allocation5 + $0x15c] sm:$0xf]
    %v212 = vld [vmem:[#allocation5 + $0x160] sm:$0xf]
    %v213 = vld [vmem:[#allocation5 + $0x164] sm:$0xf]
    %v214 = vld [vmem:[#allocation5 + $0x168] sm:$0xf]
    %v215 = vld [vmem:[#allocation5 + $0x16c] sm:$0xf]
    %v216 = vld [vmem:[#allocation5 + $0x170] sm:$0xf]
    %v217 = vld [vmem:[#allocation5 + $0x174] sm:$0xf]
    %v218 = vld [vmem:[#allocation5 + $0x178] sm:$0xf]
    %v219 = vld [vmem:[#allocation5 + $0x17c] sm:$0xf]
    %v220 = vld [vmem:[#allocation5 + $0x180] sm:$0xf]
    %v221 = vld [vmem:[#allocation5 + $0x184] sm:$0xf]
    %v222 = vld [vmem:[#allocation5 + $0x188] sm:$0xf]
    %v223 = vld [vmem:[#allocation5 + $0x18c] sm:$0xf]
    %v224 = vld [vmem:[#allocation5 + $0x190] sm:$0xf]
    %v225 = vld [vmem:[#allocation5 + $0x194] sm:$0xf]
    %v226 = vld [vmem:[#allocation5 + $0x198] sm:$0xf]
    %v227 = vld [vmem:[#allocation5 + $0x19c] sm:$0xf]
    %v228 = vld [vmem:[#allocation5 + $0x1a0] sm:$0xf]
    %v229 = vld [vmem:[#allocation5 + $0x1a4] sm:$0xf]
    %v230 = vld [vmem:[#allocation5 + $0x1a8] sm:$0xf]
    %v231 = vld [vmem:[#allocation5 + $0x1ac] sm:$0xf]
    %v232 = vld [vmem:[#allocation5 + $0x1b0] sm:$0xf]
    %v233 = vld [vmem:[#allocation5 + $0x1b4] sm:$0xf]
    %v234 = vld [vmem:[#allocation5 + $0x1b8] sm:$0xf]
    %v235 = vld [vmem:[#allocation5 + $0x1bc] sm:$0xf]
    %v236 = vld [vmem:[#allocation5 + $0x1c0] sm:$0xf]
    %v237 = vld [vmem:[#allocation5 + $0x1c4] sm:$0xf]
    %v238 = vld [vmem:[#allocation5 + $0x1c8] sm:$0xf]
    %v239 = vld [vmem:[#allocation5 + $0x1cc] sm:$0xf]
    %v240 = vld [vmem:[#allocation5 + $0x1d0] sm:$0xf]
    %v241 = vld [vmem:[#allocation5 + $0x1d4] sm:$0xf]
    %v242 = vld [vmem:[#allocation5 + $0x1d8] sm:$0xf]
    %v243 = vld [vmem:[#allocation5 + $0x1dc] sm:$0xf]
    %v244 = vld [vmem:[#allocation5 + $0x1e0] sm:$0xf]
    %v245 = vld [vmem:[#allocation5 + $0x1e4] sm:$0xf]
    %v246 = vld [vmem:[#allocation5 + $0x1e8] sm:$0xf]
    %v247 = vld [vmem:[#allocation5 + $0x1ec] sm:$0xf]
    %v248 = vld [vmem:[#allocation5 + $0x1f0] sm:$0xf]
    %v249 = vld [vmem:[#allocation5 + $0x1f4] sm:$0xf]
    %v250 = vld [vmem:[#allocation5 + $0x1f8] sm:$0xf]
    %v251 = vld [vmem:[#allocation5 + $0x1fc] sm:$0xf]
    %v252 = vld [vmem:[%s2] sm:$0x1]
    %v254 = vlaneseq
    %v255 = vshrl.u32 %v254, 7
    %v256 = vsub.s32 0, %v255
    %v257 = vrot.slane %v252, %v256
    %v263 = vunpack.c.l.b16 %v120
    %v264 = vunpack.c.h.b16 %v120
    %v265 = vunpack.c.l.b16 %v121
    %v266 = vunpack.c.h.b16 %v121
    %v267 = vunpack.c.l.b16 %v122
    %v268 = vunpack.c.h.b16 %v122
    %v269 = vunpack.c.l.b16 %v123
    %v270 = vunpack.c.h.b16 %v123
    %v271 = vpack.c.b16 %v263, %v263
    %v272 = vpack.c.b16 %v264, %v264
    %v273 = vpack.c.b16 %v265, %v265
    %v274 = vpack.c.b16 %v266, %v266
    %v275 = vpack.c.b16 %v267, %v267
    %v276 = vpack.c.b16 %v268, %v268
    %v277 = vpack.c.b16 %v269, %v269
    %v278 = vpack.c.b16 %v270, %v270
    %v415 = vunpack.c.l.b16 %v124
    %v416 = vunpack.c.l.b16 %v125
    %v417 = vunpack.c.l.b16 %v126
    %v418 = vunpack.c.l.b16 %v127
    %v419 = vunpack.c.l.b16 %v128
    %v420 = vunpack.c.l.b16 %v129
    %v421 = vunpack.c.l.b16 %v130
    %v422 = vunpack.c.l.b16 %v131
    %v423 = vunpack.c.l.b16 %v132
    %v424 = vunpack.c.l.b16 %v133
    %v425 = vunpack.c.l.b16 %v134
    %v426 = vunpack.c.l.b16 %v135
    %v427 = vunpack.c.l.b16 %v136
    %v428 = vunpack.c.l.b16 %v137
    %v429 = vunpack.c.l.b16 %v138
    %v430 = vunpack.c.l.b16 %v139
    %v431 = vunpack.c.l.b16 %v140
    %v432 = vunpack.c.l.b16 %v141
    %v433 = vunpack.c.l.b16 %v142
    %v434 = vunpack.c.l.b16 %v143
    %v435 = vunpack.c.l.b16 %v144
    %v436 = vunpack.c.l.b16 %v145
    %v437 = vunpack.c.l.b16 %v146
    %v438 = vunpack.c.l.b16 %v147
    %v439 = vunpack.c.l.b16 %v148
    %v440 = vunpack.c.l.b16 %v149
    %v441 = vunpack.c.l.b16 %v150
    %v442 = vunpack.c.l.b16 %v151
    %v443 = vunpack.c.l.b16 %v152
    %v444 = vunpack.c.l.b16 %v153
    %v445 = vunpack.c.l.b16 %v154
    %v446 = vunpack.c.l.b16 %v155
    %v447 = vunpack.c.l.b16 %v156
    %v448 = vunpack.c.l.b16 %v157
    %v449 = vunpack.c.l.b16 %v158
    %v450 = vunpack.c.l.b16 %v159
    %v451 = vunpack.c.l.b16 %v160
    %v452 = vunpack.c.l.b16 %v161
    %v453 = vunpack.c.l.b16 %v162
    %v454 = vunpack.c.l.b16 %v163
    %v455 = vunpack.c.l.b16 %v164
    %v456 = vunpack.c.l.b16 %v165
    %v457 = vunpack.c.l.b16 %v166
    %v458 = vunpack.c.l.b16 %v167
    %v459 = vunpack.c.l.b16 %v168
    %v460 = vunpack.c.l.b16 %v169
    %v461 = vunpack.c.l.b16 %v170
    %v462 = vunpack.c.l.b16 %v171
    %v463 = vunpack.c.l.b16 %v172
    %v464 = vunpack.c.l.b16 %v173
    %v465 = vunpack.c.l.b16 %v174
    %v466 = vunpack.c.l.b16 %v175
    %v467 = vunpack.c.l.b16 %v176
    %v468 = vunpack.c.l.b16 %v177
    %v469 = vunpack.c.l.b16 %v178
    %v470 = vunpack.c.l.b16 %v179
    %v471 = vunpack.c.l.b16 %v180
    %v472 = vunpack.c.l.b16 %v181
    %v473 = vunpack.c.l.b16 %v182
    %v474 = vunpack.c.l.b16 %v183
    %v475 = vunpack.c.l.b16 %v184
    %v476 = vunpack.c.l.b16 %v185
    %v477 = vunpack.c.l.b16 %v186
    %v478 = vunpack.c.l.b16 %v187
    %v479 = vunpack.c.l.b16 %v188
    %v480 = vunpack.c.l.b16 %v189
    %v481 = vunpack.c.l.b16 %v190
    %v482 = vunpack.c.l.b16 %v191
    %v483 = vunpack.c.l.b16 %v192
    %v484 = vunpack.c.l.b16 %v193
    %v485 = vunpack.c.l.b16 %v194
    %v486 = vunpack.c.l.b16 %v195
    %v487 = vunpack.c.l.b16 %v196
    %v488 = vunpack.c.l.b16 %v197
    %v489 = vunpack.c.l.b16 %v198
    %v490 = vunpack.c.l.b16 %v199
    %v491 = vunpack.c.l.b16 %v200
    %v492 = vunpack.c.l.b16 %v201
    %v493 = vunpack.c.l.b16 %v202
    %v494 = vunpack.c.l.b16 %v203
    %v495 = vunpack.c.l.b16 %v204
    %v496 = vunpack.c.l.b16 %v205
    %v497 = vunpack.c.l.b16 %v206
    %v498 = vunpack.c.l.b16 %v207
    %v499 = vunpack.c.l.b16 %v208
    %v500 = vunpack.c.l.b16 %v209
    %v501 = vunpack.c.l.b16 %v210
    %v502 = vunpack.c.l.b16 %v211
    %v503 = vunpack.c.l.b16 %v212
    %v504 = vunpack.c.l.b16 %v213
    %v505 = vunpack.c.l.b16 %v214
    %v506 = vunpack.c.l.b16 %v215
    %v507 = vunpack.c.l.b16 %v216
    %v508 = vunpack.c.l.b16 %v217
    %v509 = vunpack.c.l.b16 %v218
    %v510 = vunpack.c.l.b16 %v219
    %v511 = vunpack.c.l.b16 %v220
    %v512 = vunpack.c.l.b16 %v221
    %v513 = vunpack.c.l.b16 %v222
    %v514 = vunpack.c.l.b16 %v223
    %v515 = vunpack.c.l.b16 %v224
    %v516 = vunpack.c.l.b16 %v225
    %v517 = vunpack.c.l.b16 %v226
    %v518 = vunpack.c.l.b16 %v227
    %v519 = vunpack.c.l.b16 %v228
    %v520 = vunpack.c.l.b16 %v229
    %v521 = vunpack.c.l.b16 %v230
    %v522 = vunpack.c.l.b16 %v231
    %v523 = vunpack.c.l.b16 %v232
    %v524 = vunpack.c.l.b16 %v233
    %v525 = vunpack.c.l.b16 %v234
    %v526 = vunpack.c.l.b16 %v235
    %v527 = vunpack.c.l.b16 %v236
    %v528 = vunpack.c.l.b16 %v237
    %v529 = vunpack.c.l.b16 %v238
    %v530 = vunpack.c.l.b16 %v239
    %v531 = vunpack.c.l.b16 %v240
    %v532 = vunpack.c.l.b16 %v241
    %v533 = vunpack.c.l.b16 %v242
    %v534 = vunpack.c.l.b16 %v243
    %v535 = vunpack.c.l.b16 %v244
    %v536 = vunpack.c.l.b16 %v245
    %v537 = vunpack.c.l.b16 %v246
    %v538 = vunpack.c.l.b16 %v247
    %v539 = vunpack.c.l.b16 %v248
    %v540 = vunpack.c.l.b16 %v249
    %v541 = vunpack.c.l.b16 %v250
    %v542 = vunpack.c.l.b16 %v251
    %v543 = vpack.c.b16 %v416, %v415
    %v544 = vpack.c.b16 %v418, %v417
    %v545 = vpack.c.b16 %v420, %v419
    %v546 = vpack.c.b16 %v422, %v421
    %v547 = vpack.c.b16 %v424, %v423
    %v548 = vpack.c.b16 %v426, %v425
    %v549 = vpack.c.b16 %v428, %v427
    %v550 = vpack.c.b16 %v430, %v429
    %v551 = vpack.c.b16 %v432, %v431
    %v552 = vpack.c.b16 %v434, %v433
    %v553 = vpack.c.b16 %v436, %v435
    %v554 = vpack.c.b16 %v438, %v437
    %v555 = vpack.c.b16 %v440, %v439
    %v556 = vpack.c.b16 %v442, %v441
    %v557 = vpack.c.b16 %v444, %v443
    %v558 = vpack.c.b16 %v446, %v445
    %v559 = vpack.c.b16 %v448, %v447
    %v560 = vpack.c.b16 %v450, %v449
    %v561 = vpack.c.b16 %v452, %v451
    %v562 = vpack.c.b16 %v454, %v453
    %v563 = vpack.c.b16 %v456, %v455
    %v564 = vpack.c.b16 %v458, %v457
    %v565 = vpack.c.b16 %v460, %v459
    %v566 = vpack.c.b16 %v462, %v461
    %v567 = vpack.c.b16 %v464, %v463
    %v568 = vpack.c.b16 %v466, %v465
    %v569 = vpack.c.b16 %v468, %v467
    %v570 = vpack.c.b16 %v470, %v469
    %v571 = vpack.c.b16 %v472, %v471
    %v572 = vpack.c.b16 %v474, %v473
    %v573 = vpack.c.b16 %v476, %v475
    %v574 = vpack.c.b16 %v478, %v477
    %v575 = vpack.c.b16 %v480, %v479
    %v576 = vpack.c.b16 %v482, %v481
    %v577 = vpack.c.b16 %v484, %v483
    %v578 = vpack.c.b16 %v486, %v485
    %v579 = vpack.c.b16 %v488, %v487
    %v580 = vpack.c.b16 %v490, %v489
    %v581 = vpack.c.b16 %v492, %v491
    %v582 = vpack.c.b16 %v494, %v493
    %v583 = vpack.c.b16 %v496, %v495
    %v584 = vpack.c.b16 %v498, %v497
    %v585 = vpack.c.b16 %v500, %v499
    %v586 = vpack.c.b16 %v502, %v501
    %v587 = vpack.c.b16 %v504, %v503
    %v588 = vpack.c.b16 %v506, %v505
    %v589 = vpack.c.b16 %v508, %v507
    %v590 = vpack.c.b16 %v510, %v509
    %v591 = vpack.c.b16 %v512, %v511
    %v592 = vpack.c.b16 %v514, %v513
    %v593 = vpack.c.b16 %v516, %v515
    %v594 = vpack.c.b16 %v518, %v517
    %v595 = vpack.c.b16 %v520, %v519
    %v596 = vpack.c.b16 %v522, %v521
    %v597 = vpack.c.b16 %v524, %v523
    %v598 = vpack.c.b16 %v526, %v525
    %v599 = vpack.c.b16 %v528, %v527
    %v600 = vpack.c.b16 %v530, %v529
    %v601 = vpack.c.b16 %v532, %v531
    %v602 = vpack.c.b16 %v534, %v533
    %v603 = vpack.c.b16 %v536, %v535
    %v604 = vpack.c.b16 %v538, %v537
    %v605 = vpack.c.b16 %v540, %v539
    %v606 = vpack.c.b16 %v542, %v541
    %671 = vmatprep.subr.bf16.mxu0 0
    %672 = vmatpush1.bf16.msra.mxu0 %v550
    %673 = vmatprep.subr.bf16.mxu0 0
    %674 = vmatpush1.bf16.msra.mxu0 %v549
    %675 = vmatprep.subr.bf16.mxu0 0
    %676 = vmatpush1.bf16.msra.mxu0 %v548
    %677 = vmatprep.subr.bf16.mxu0 0
    %678 = vmatpush1.bf16.msra.mxu0 %v547
    %679 = vmatprep.subr.bf16.mxu0 0
    %680 = vmatpush1.bf16.msra.mxu0 %v546
    %681 = vmatprep.subr.bf16.mxu0 0
    %682 = vmatpush1.bf16.msra.mxu0 %v545
    %683 = vmatprep.subr.bf16.mxu0 0
    %684 = vmatpush1.bf16.msra.mxu0 %v544
    %685 = vmatprep.subr.bf16.mxu0 0
    %686 = vmatpush1.bf16.msra.mxu0 %v543
    %687 = vmatprep.subr.bf16.mxu0 0
    %688 = vmatpush2.bf16.msra.mxu0 %v558
    %689 = vmatprep.subr.bf16.mxu0 0
    %690 = vmatpush2.bf16.msra.mxu0 %v557
    %691 = vmatprep.subr.bf16.mxu0 0
    %692 = vmatpush2.bf16.msra.mxu0 %v556
    %693 = vmatprep.subr.bf16.mxu0 0
    %694 = vmatpush2.bf16.msra.mxu0 %v555
    %695 = vmatprep.subr.bf16.mxu0 0
    %696 = vmatpush2.bf16.msra.mxu0 %v554
    %697 = vmatprep.subr.bf16.mxu0 0
    %698 = vmatpush2.bf16.msra.mxu0 %v553
    %699 = vmatprep.subr.bf16.mxu0 0
    %700 = vmatpush2.bf16.msra.mxu0 %v552
    %701 = vmatprep.subr.bf16.mxu0 0
    %702 = vmatpush2.bf16.msra.mxu0 %v551
    %703 = vmatprep.mubr.bf16.mxu0 %v272
    %704 = vmatmul.mubr.bf16.gmra.mxu0 %v271
    %v705 = vpop.f32.mrf.mxu0
    %v706 = vadd.f32 %v257, %v705
    %v707 = vpop.f32.mrf.mxu0
    %v708 = vpop.f32.mrf.mxu0
    %v709 = vpop.f32.mrf.mxu0
    %710 = vdwg.mxu0
    %711 = vmatprep.subr.bf16.mxu0 0
    %712 = vmatpush1.bf16.msra.mxu0 %v566
    %713 = vmatprep.subr.bf16.mxu0 0
    %714 = vmatpush1.bf16.msra.mxu0 %v565
    %715 = vmatprep.subr.bf16.mxu0 0
    %716 = vmatpush1.bf16.msra.mxu0 %v564
    %717 = vmatprep.subr.bf16.mxu0 0
    %718 = vmatpush1.bf16.msra.mxu0 %v563
    %719 = vmatprep.subr.bf16.mxu0 0
    %720 = vmatpush1.bf16.msra.mxu0 %v562
    %721 = vmatprep.subr.bf16.mxu0 0
    %722 = vmatpush1.bf16.msra.mxu0 %v561
    %723 = vmatprep.subr.bf16.mxu0 0
    %724 = vmatpush1.bf16.msra.mxu0 %v560
    %725 = vmatprep.subr.bf16.mxu0 0
    %726 = vmatpush1.bf16.msra.mxu0 %v559
    %727 = vmatprep.subr.bf16.mxu0 0
    %728 = vmatpush2.bf16.msra.mxu0 %v574
    %729 = vmatprep.subr.bf16.mxu0 0
    %730 = vmatpush2.bf16.msra.mxu0 %v573
    %731 = vmatprep.subr.bf16.mxu0 0
    %732 = vmatpush2.bf16.msra.mxu0 %v572
    %733 = vmatprep.subr.bf16.mxu0 0
    %734 = vmatpush2.bf16.msra.mxu0 %v571
    %735 = vmatprep.subr.bf16.mxu0 0
    %736 = vmatpush2.bf16.msra.mxu0 %v570
    %737 = vmatprep.subr.bf16.mxu0 0
    %738 = vmatpush2.bf16.msra.mxu0 %v569
    %739 = vmatprep.subr.bf16.mxu0 0
    %740 = vmatpush2.bf16.msra.mxu0 %v568
    %741 = vmatprep.subr.bf16.mxu0 0
    %742 = vmatpush2.bf16.msra.mxu0 %v567
    %743 = vmatprep.mubr.bf16.mxu0 %v274
    %744 = vmatmul.mubr.bf16.gmra.mxu0 %v273
    %v745 = vpop.f32.mrf.mxu0
    %v746 = vadd.f32 %v706, %v745
    %v747 = vpop.f32.mrf.mxu0
    %v748 = vpop.f32.mrf.mxu0
    %v749 = vpop.f32.mrf.mxu0
    %750 = vdwg.mxu0
    %751 = vmatprep.subr.bf16.mxu0 0
    %752 = vmatpush1.bf16.msra.mxu0 %v582
    %753 = vmatprep.subr.bf16.mxu0 0
    %754 = vmatpush1.bf16.msra.mxu0 %v581
    %755 = vmatprep.subr.bf16.mxu0 0
    %756 = vmatpush1.bf16.msra.mxu0 %v580
    %757 = vmatprep.subr.bf16.mxu0 0
    %758 = vmatpush1.bf16.msra.mxu0 %v579
    %759 = vmatprep.subr.bf16.mxu0 0
    %760 = vmatpush1.bf16.msra.mxu0 %v578
    %761 = vmatprep.subr.bf16.mxu0 0
    %762 = vmatpush1.bf16.msra.mxu0 %v577
    %763 = vmatprep.subr.bf16.mxu0 0
    %764 = vmatpush1.bf16.msra.mxu0 %v576
    %765 = vmatprep.subr.bf16.mxu0 0
    %766 = vmatpush1.bf16.msra.mxu0 %v575
    %767 = vmatprep.subr.bf16.mxu0 0
    %768 = vmatpush2.bf16.msra.mxu0 %v590
    %769 = vmatprep.subr.bf16.mxu0 0
    %770 = vmatpush2.bf16.msra.mxu0 %v589
    %771 = vmatprep.subr.bf16.mxu0 0
    %772 = vmatpush2.bf16.msra.mxu0 %v588
    %773 = vmatprep.subr.bf16.mxu0 0
    %774 = vmatpush2.bf16.msra.mxu0 %v587
    %775 = vmatprep.subr.bf16.mxu0 0
    %776 = vmatpush2.bf16.msra.mxu0 %v586
    %777 = vmatprep.subr.bf16.mxu0 0
    %778 = vmatpush2.bf16.msra.mxu0 %v585
    %779 = vmatprep.subr.bf16.mxu0 0
    %780 = vmatpush2.bf16.msra.mxu0 %v584
    %781 = vmatprep.subr.bf16.mxu0 0
    %782 = vmatpush2.bf16.msra.mxu0 %v583
    %783 = vmatprep.mubr.bf16.mxu0 %v276
    %784 = vmatmul.mubr.bf16.gmra.mxu0 %v275
    %v785 = vpop.f32.mrf.mxu0
    %v786 = vadd.f32 %v746, %v785
    %v787 = vpop.f32.mrf.mxu0
    %v788 = vpop.f32.mrf.mxu0
    %v789 = vpop.f32.mrf.mxu0
    %790 = vdwg.mxu0
    %791 = vmatprep.subr.bf16.mxu0 0
    %792 = vmatpush1.bf16.msra.mxu0 %v598
    %793 = vmatprep.subr.bf16.mxu0 0
    %794 = vmatpush1.bf16.msra.mxu0 %v597
    %795 = vmatprep.subr.bf16.mxu0 0
    %796 = vmatpush1.bf16.msra.mxu0 %v596
    %797 = vmatprep.subr.bf16.mxu0 0
    %798 = vmatpush1.bf16.msra.mxu0 %v595
    %799 = vmatprep.subr.bf16.mxu0 0
    %800 = vmatpush1.bf16.msra.mxu0 %v594
    %801 = vmatprep.subr.bf16.mxu0 0
    %802 = vmatpush1.bf16.msra.mxu0 %v593
    %803 = vmatprep.subr.bf16.mxu0 0
    %804 = vmatpush1.bf16.msra.mxu0 %v592
    %805 = vmatprep.subr.bf16.mxu0 0
    %806 = vmatpush1.bf16.msra.mxu0 %v591
    %807 = vmatprep.subr.bf16.mxu0 0
    %808 = vmatpush2.bf16.msra.mxu0 %v606
    %809 = vmatprep.subr.bf16.mxu0 0
    %810 = vmatpush2.bf16.msra.mxu0 %v605
    %811 = vmatprep.subr.bf16.mxu0 0
    %812 = vmatpush2.bf16.msra.mxu0 %v604
    %813 = vmatprep.subr.bf16.mxu0 0
    %814 = vmatpush2.bf16.msra.mxu0 %v603
    %815 = vmatprep.subr.bf16.mxu0 0
    %816 = vmatpush2.bf16.msra.mxu0 %v602
    %817 = vmatprep.subr.bf16.mxu0 0
    %818 = vmatpush2.bf16.msra.mxu0 %v601
    %819 = vmatprep.subr.bf16.mxu0 0
    %820 = vmatpush2.bf16.msra.mxu0 %v600
    %821 = vmatprep.subr.bf16.mxu0 0
    %822 = vmatpush2.bf16.msra.mxu0 %v599
    %823 = vmatprep.mubr.bf16.mxu0 %v278
    %824 = vmatmul.mubr.bf16.gmra.mxu0 %v277
    %v825 = vpop.f32.mrf.mxu0
    %v826 = vadd.f32 %v786, %v825
    %v827 = vpop.f32.mrf.mxu0
    %v828 = vpop.f32.mrf.mxu0
    %v829 = vpop.f32.mrf.mxu0
    %830 = vdwg.mxu0
    %vm831 = vcmp.gt.f32.partialorder %v826, 0.0
    %v832 = vmul.f32 %v826, 1.442695
    %v833 = vpow.pop %v832
    %v834 = vsub.f32 %v833, 1.0
    %v835 = vmul.f32 %v834, 1.6732632
    %v836 = vsel %vm831, %v826, %v835
    %v837 = vmul.f32 %v836, 1.050701
    %v838 = vpack.c.bf16 %v837, %v837
    %v839 = vld [vmem:[#allocation7] sm:$0xf]
    %v840 = vld [vmem:[#allocation7 + $0x4] sm:$0xf]
    %v841 = vld [vmem:[#allocation7 + $0x8] sm:$0xf]
    %v842 = vld [vmem:[#allocation7 + $0xc] sm:$0xf]
    %v843 = vld [vmem:[#allocation7 + $0x10] sm:$0xf]
    %v844 = vld [vmem:[#allocation7 + $0x14] sm:$0xf]
    %v845 = vld [vmem:[#allocation7 + $0x18] sm:$0xf]
    %v846 = vld [vmem:[#allocation7 + $0x1c] sm:$0xf]
    %v847 = vld [vmem:[#allocation7 + $0x20] sm:$0xf]
    %v848 = vld [vmem:[#allocation7 + $0x24] sm:$0xf]
    %v849 = vld [vmem:[#allocation7 + $0x28] sm:$0xf]
    %v850 = vld [vmem:[#allocation7 + $0x2c] sm:$0xf]
    %v851 = vld [vmem:[#allocation7 + $0x30] sm:$0xf]
    %v852 = vld [vmem:[#allocation7 + $0x34] sm:$0xf]
    %v853 = vld [vmem:[#allocation7 + $0x38] sm:$0xf]
    %v854 = vld [vmem:[#allocation7 + $0x3c] sm:$0xf]
    %v855 = vld [vmem:[%s4] sm:$0x1]
    %v857 = vlaneseq
    %v858 = vshrl.u32 %v857, 7
    %v859 = vsub.s32 0, %v858
    %v860 = vrot.slane %v855, %v859
    %v878 = vunpack.c.l.b16 %v839
    %v879 = vunpack.c.l.b16 %v840
    %v880 = vunpack.c.l.b16 %v841
    %v881 = vunpack.c.l.b16 %v842
    %v882 = vunpack.c.l.b16 %v843
    %v883 = vunpack.c.l.b16 %v844
    %v884 = vunpack.c.l.b16 %v845
    %v885 = vunpack.c.l.b16 %v846
    %v886 = vunpack.c.l.b16 %v847
    %v887 = vunpack.c.l.b16 %v848
    %v888 = vunpack.c.l.b16 %v849
    %v889 = vunpack.c.l.b16 %v850
    %v890 = vunpack.c.l.b16 %v851
    %v891 = vunpack.c.l.b16 %v852
    %v892 = vunpack.c.l.b16 %v853
    %v893 = vunpack.c.l.b16 %v854
    %v894 = vpack.c.b16 %v879, %v878
    %v895 = vpack.c.b16 %v881, %v880
    %v896 = vpack.c.b16 %v883, %v882
    %v897 = vpack.c.b16 %v885, %v884
    %v898 = vpack.c.b16 %v887, %v886
    %v899 = vpack.c.b16 %v889, %v888
    %v900 = vpack.c.b16 %v891, %v890
    %v901 = vpack.c.b16 %v893, %v892
    %910 = vmatprep.subr.bf16.mxu0 0
    %911 = vmatpush1.bf16.msra.mxu0 %v901
    %912 = vmatprep.subr.bf16.mxu0 0
    %913 = vmatpush1.bf16.msra.mxu0 %v900
    %914 = vmatprep.subr.bf16.mxu0 0
    %915 = vmatpush1.bf16.msra.mxu0 %v899
    %916 = vmatprep.subr.bf16.mxu0 0
    %917 = vmatpush1.bf16.msra.mxu0 %v898
    %918 = vmatprep.subr.bf16.mxu0 0
    %919 = vmatpush1.bf16.msra.mxu0 %v897
    %920 = vmatprep.subr.bf16.mxu0 0
    %921 = vmatpush1.bf16.msra.mxu0 %v896
    %922 = vmatprep.subr.bf16.mxu0 0
    %923 = vmatpush1.bf16.msra.mxu0 %v895
    %924 = vmatprep.subr.bf16.mxu0 0
    %925 = vmatpush1.bf16.msra.mxu0 %v894
    %926 = vmatprep.subr.bf16.mxu0 0
    %927 = vmatpush2.bf16.msra.mxu0 0
    %928 = vmatprep.subr.bf16.mxu0 0
    %929 = vmatpush2.bf16.msra.mxu0 0
    %930 = vmatprep.subr.bf16.mxu0 0
    %931 = vmatpush2.bf16.msra.mxu0 0
    %932 = vmatprep.subr.bf16.mxu0 0
    %933 = vmatpush2.bf16.msra.mxu0 0
    %934 = vmatprep.subr.bf16.mxu0 0
    %935 = vmatpush2.bf16.msra.mxu0 0
    %936 = vmatprep.subr.bf16.mxu0 0
    %937 = vmatpush2.bf16.msra.mxu0 0
    %938 = vmatprep.subr.bf16.mxu0 0
    %939 = vmatpush2.bf16.msra.mxu0 0
    %940 = vmatprep.subr.bf16.mxu0 0
    %941 = vmatpush2.bf16.msra.mxu0 0
    %942 = vmatprep.mubr.bf16.mxu0 0
    %943 = vmatmul.mubr.bf16.gmra.mxu0 %v838
    %v944 = vpop.f32.mrf.mxu0
    %v945 = vadd.f32 %v860, %v944
    %v946 = vpop.f32.mrf.mxu0
    %v947 = vpop.f32.mrf.mxu0
    %v948 = vpop.f32.mrf.mxu0
    %949 = vdwg.mxu0
    %vm950 = vcmp.gt.f32.partialorder %v945, 0.0
    %v951 = vmul.f32 %v945, 1.442695
    %v952 = vpow.pop %v951
    %v953 = vsub.f32 %v952, 1.0
    %v954 = vmul.f32 %v953, 1.6732632
    %v955 = vsel %vm950, %v945, %v954
    %v956 = vmul.f32 %v955, 1.050701
    %v957 = vpack.c.bf16 %v956, %v956
    %v958 = vld [vmem:[#allocation8] sm:$0xf]
    %v959 = vld [vmem:[#allocation8 + $0x4] sm:$0xf]
    %v960 = vld [vmem:[#allocation8 + $0x8] sm:$0xf]
    %v961 = vld [vmem:[#allocation8 + $0xc] sm:$0xf]
    %v962 = vld [vmem:[#allocation8 + $0x10] sm:$0xf]
    %v963 = vld [vmem:[#allocation8 + $0x14] sm:$0xf]
    %v964 = vld [vmem:[#allocation8 + $0x18] sm:$0xf]
    %v965 = vld [vmem:[#allocation8 + $0x1c] sm:$0xf]
    %v966 = vld [vmem:[#allocation8 + $0x20] sm:$0xf]
    %v967 = vld [vmem:[#allocation8 + $0x24] sm:$0xf]
    %v968 = vld [vmem:[#allocation8 + $0x28] sm:$0xf]
    %v969 = vld [vmem:[#allocation8 + $0x2c] sm:$0xf]
    %v970 = vld [vmem:[#allocation8 + $0x30] sm:$0xf]
    %v971 = vld [vmem:[#allocation8 + $0x34] sm:$0xf]
    %v972 = vld [vmem:[#allocation8 + $0x38] sm:$0xf]
    %v973 = vld [vmem:[#allocation8 + $0x3c] sm:$0xf]
    %v974 = vld [vmem:[%s6] sm:$0x1]
    %v976 = vlaneseq
    %v977 = vshrl.u32 %v976, 7
    %v978 = vsub.s32 0, %v977
    %v979 = vrot.slane %v974, %v978
    %v997 = vunpack.c.l.b16 %v958
    %v998 = vunpack.c.l.b16 %v959
    %v999 = vunpack.c.l.b16 %v960
    %v1000 = vunpack.c.l.b16 %v961
    %v1001 = vunpack.c.l.b16 %v962
    %v1002 = vunpack.c.l.b16 %v963
    %v1003 = vunpack.c.l.b16 %v964
    %v1004 = vunpack.c.l.b16 %v965
    %v1005 = vunpack.c.l.b16 %v966
    %v1006 = vunpack.c.l.b16 %v967
    %v1007 = vunpack.c.l.b16 %v968
    %v1008 = vunpack.c.l.b16 %v969
    %v1009 = vunpack.c.l.b16 %v970
    %v1010 = vunpack.c.l.b16 %v971
    %v1011 = vunpack.c.l.b16 %v972
    %v1012 = vunpack.c.l.b16 %v973
    %v1013 = vpack.c.b16 %v998, %v997
    %v1014 = vpack.c.b16 %v1000, %v999
    %v1015 = vpack.c.b16 %v1002, %v1001
    %v1016 = vpack.c.b16 %v1004, %v1003
    %v1017 = vpack.c.b16 %v1006, %v1005
    %v1018 = vpack.c.b16 %v1008, %v1007
    %v1019 = vpack.c.b16 %v1010, %v1009
    %v1020 = vpack.c.b16 %v1012, %v1011
    %1029 = vmatprep.subr.bf16.mxu0 0
    %1030 = vmatpush1.bf16.msra.mxu0 %v1020
    %1031 = vmatprep.subr.bf16.mxu0 0
    %1032 = vmatpush1.bf16.msra.mxu0 %v1019
    %1033 = vmatprep.subr.bf16.mxu0 0
    %1034 = vmatpush1.bf16.msra.mxu0 %v1018
    %1035 = vmatprep.subr.bf16.mxu0 0
    %1036 = vmatpush1.bf16.msra.mxu0 %v1017
    %1037 = vmatprep.subr.bf16.mxu0 0
    %1038 = vmatpush1.bf16.msra.mxu0 %v1016
    %1039 = vmatprep.subr.bf16.mxu0 0
    %1040 = vmatpush1.bf16.msra.mxu0 %v1015
    %1041 = vmatprep.subr.bf16.mxu0 0
    %1042 = vmatpush1.bf16.msra.mxu0 %v1014
    %1043 = vmatprep.subr.bf16.mxu0 0
    %1044 = vmatpush1.bf16.msra.mxu0 %v1013
    %1045 = vmatprep.subr.bf16.mxu0 0
    %1046 = vmatpush2.bf16.msra.mxu0 0
    %1047 = vmatprep.subr.bf16.mxu0 0
    %1048 = vmatpush2.bf16.msra.mxu0 0
    %1049 = vmatprep.subr.bf16.mxu0 0
    %1050 = vmatpush2.bf16.msra.mxu0 0
    %1051 = vmatprep.subr.bf16.mxu0 0
    %1052 = vmatpush2.bf16.msra.mxu0 0
    %1053 = vmatprep.subr.bf16.mxu0 0
    %1054 = vmatpush2.bf16.msra.mxu0 0
    %1055 = vmatprep.subr.bf16.mxu0 0
    %1056 = vmatpush2.bf16.msra.mxu0 0
    %1057 = vmatprep.subr.bf16.mxu0 0
    %1058 = vmatpush2.bf16.msra.mxu0 0
    %1059 = vmatprep.subr.bf16.mxu0 0
    %1060 = vmatpush2.bf16.msra.mxu0 0
    %1061 = vmatprep.mubr.bf16.mxu0 0
    %1062 = vmatmul.mubr.bf16.gmra.mxu0 %v957
    %v1063 = vpop.f32.mrf.mxu0
    %v1064 = vadd.f32 %v979, %v1063
    %v1065 = vpop.f32.mrf.mxu0
    %v1066 = vpop.f32.mrf.mxu0
    %v1067 = vpop.f32.mrf.mxu0
    %1068 = vdwg.mxu0
    %vm1069 = vcmp.gt.f32.partialorder %v1064, 0.0
    %v1070 = vmul.f32 %v1064, 1.442695
    %v1071 = vpow.pop %v1070
    %v1072 = vsub.f32 %v1071, 1.0
    %v1073 = vmul.f32 %v1072, 1.6732632
    %v1074 = vsel %vm1069, %v1064, %v1073
    %v1075 = vmul.f32 %v1074, 1.050701
    %v1076 = vpack.c.bf16 %v1075, %v1075
    %v1077 = vld [vmem:[#allocation10] sm:$0xf]
    %v1078 = vld [vmem:[#allocation10 + $0x4] sm:$0xf]
    %v1079 = vld [vmem:[#allocation10 + $0x8] sm:$0xf]
    %v1080 = vld [vmem:[#allocation10 + $0xc] sm:$0xf]
    %v1081 = vld [vmem:[#allocation10 + $0x10] sm:$0xf]
    %v1082 = vld [vmem:[#allocation10 + $0x14] sm:$0xf]
    %v1083 = vld [vmem:[#allocation10 + $0x18] sm:$0xf]
    %v1084 = vld [vmem:[#allocation10 + $0x1c] sm:$0xf]
    %v1085 = vld [vmem:[#allocation10 + $0x20] sm:$0xf]
    %v1086 = vld [vmem:[#allocation10 + $0x24] sm:$0xf]
    %v1087 = vld [vmem:[#allocation10 + $0x28] sm:$0xf]
    %v1088 = vld [vmem:[#allocation10 + $0x2c] sm:$0xf]
    %v1089 = vld [vmem:[#allocation10 + $0x30] sm:$0xf]
    %v1090 = vld [vmem:[#allocation10 + $0x34] sm:$0xf]
    %v1091 = vld [vmem:[#allocation10 + $0x38] sm:$0xf]
    %v1092 = vld [vmem:[#allocation10 + $0x3c] sm:$0xf]
    %v1093 = vld [vmem:[%s8] sm:$0x1]
    %v1095 = vlaneseq
    %v1096 = vshrl.u32 %v1095, 7
    %v1097 = vsub.s32 0, %v1096
    %v1098 = vrot.slane %v1093, %v1097
    %v1116 = vunpack.c.l.b16 %v1077
    %v1117 = vunpack.c.l.b16 %v1078
    %v1118 = vunpack.c.l.b16 %v1079
    %v1119 = vunpack.c.l.b16 %v1080
    %v1120 = vunpack.c.l.b16 %v1081
    %v1121 = vunpack.c.l.b16 %v1082
    %v1122 = vunpack.c.l.b16 %v1083
    %v1123 = vunpack.c.l.b16 %v1084
    %v1124 = vunpack.c.l.b16 %v1085
    %v1125 = vunpack.c.l.b16 %v1086
    %v1126 = vunpack.c.l.b16 %v1087
    %v1127 = vunpack.c.l.b16 %v1088
    %v1128 = vunpack.c.l.b16 %v1089
    %v1129 = vunpack.c.l.b16 %v1090
    %v1130 = vunpack.c.l.b16 %v1091
    %v1131 = vunpack.c.l.b16 %v1092
    %v1132 = vpack.c.b16 %v1117, %v1116
    %v1133 = vpack.c.b16 %v1119, %v1118
    %v1134 = vpack.c.b16 %v1121, %v1120
    %v1135 = vpack.c.b16 %v1123, %v1122
    %v1136 = vpack.c.b16 %v1125, %v1124
    %v1137 = vpack.c.b16 %v1127, %v1126
    %v1138 = vpack.c.b16 %v1129, %v1128
    %v1139 = vpack.c.b16 %v1131, %v1130
    %1148 = vmatprep.subr.bf16.mxu0 0
    %1149 = vmatpush1.bf16.msra.mxu0 %v1139
    %1150 = vmatprep.subr.bf16.mxu0 0
    %1151 = vmatpush1.bf16.msra.mxu0 %v1138
    %1152 = vmatprep.subr.bf16.mxu0 0
    %1153 = vmatpush1.bf16.msra.mxu0 %v1137
    %1154 = vmatprep.subr.bf16.mxu0 0
    %1155 = vmatpush1.bf16.msra.mxu0 %v1136
    %1156 = vmatprep.subr.bf16.mxu0 0
    %1157 = vmatpush1.bf16.msra.mxu0 %v1135
    %1158 = vmatprep.subr.bf16.mxu0 0
    %1159 = vmatpush1.bf16.msra.mxu0 %v1134
    %1160 = vmatprep.subr.bf16.mxu0 0
    %1161 = vmatpush1.bf16.msra.mxu0 %v1133
    %1162 = vmatprep.subr.bf16.mxu0 0
    %1163 = vmatpush1.bf16.msra.mxu0 %v1132
    %1164 = vmatprep.subr.bf16.mxu0 0
    %1165 = vmatpush2.bf16.msra.mxu0 0
    %1166 = vmatprep.subr.bf16.mxu0 0
    %1167 = vmatpush2.bf16.msra.mxu0 0
    %1168 = vmatprep.subr.bf16.mxu0 0
    %1169 = vmatpush2.bf16.msra.mxu0 0
    %1170 = vmatprep.subr.bf16.mxu0 0
    %1171 = vmatpush2.bf16.msra.mxu0 0
    %1172 = vmatprep.subr.bf16.mxu0 0
    %1173 = vmatpush2.bf16.msra.mxu0 0
    %1174 = vmatprep.subr.bf16.mxu0 0
    %1175 = vmatpush2.bf16.msra.mxu0 0
    %1176 = vmatprep.subr.bf16.mxu0 0
    %1177 = vmatpush2.bf16.msra.mxu0 0
    %1178 = vmatprep.subr.bf16.mxu0 0
    %1179 = vmatpush2.bf16.msra.mxu0 0
    %1180 = vmatprep.mubr.bf16.mxu0 0
    %1181 = vmatmul.mubr.bf16.gmra.mxu0 %v1076
    %v1182 = vpop.f32.mrf.mxu0
    %v1183 = vadd.f32 %v1098, %v1182
    %v1184 = vpop.f32.mrf.mxu0
    %v1185 = vpop.f32.mrf.mxu0
    %v1186 = vpop.f32.mrf.mxu0
    %1187 = vdwg.mxu0
    %vm1188 = vcmp.gt.f32.partialorder %v1183, 0.0
    %v1189 = vmul.f32 %v1183, 1.442695
    %v1190 = vpow.pop %v1189
    %v1191 = vsub.f32 %v1190, 1.0
    %v1192 = vmul.f32 %v1191, 1.6732632
    %v1193 = vsel %vm1188, %v1183, %v1192
    %v1194 = vmul.f32 %v1193, 1.050701
    %v1195 = vpack.c.bf16 %v1194, %v1194
    %v1196 = vld [vmem:[#allocation11] sm:$0xf]
    %v1197 = vld [vmem:[#allocation11 + $0x4] sm:$0xf]
    %v1198 = vld [vmem:[#allocation11 + $0x8] sm:$0xf]
    %v1199 = vld [vmem:[#allocation11 + $0xc] sm:$0xf]
    %v1200 = vld [vmem:[#allocation11 + $0x10] sm:$0xf]
    %v1201 = vld [vmem:[#allocation11 + $0x14] sm:$0xf]
    %v1202 = vld [vmem:[#allocation11 + $0x18] sm:$0xf]
    %v1203 = vld [vmem:[#allocation11 + $0x1c] sm:$0xf]
    %v1204 = vld [vmem:[#allocation11 + $0x20] sm:$0xf]
    %v1205 = vld [vmem:[#allocation11 + $0x24] sm:$0xf]
    %v1206 = vld [vmem:[#allocation11 + $0x28] sm:$0xf]
    %v1207 = vld [vmem:[#allocation11 + $0x2c] sm:$0xf]
    %v1208 = vld [vmem:[#allocation11 + $0x30] sm:$0xf]
    %v1209 = vld [vmem:[#allocation11 + $0x34] sm:$0xf]
    %v1210 = vld [vmem:[#allocation11 + $0x38] sm:$0xf]
    %v1211 = vld [vmem:[#allocation11 + $0x3c] sm:$0xf]
    %v1212 = vld [vmem:[%s10] sm:$0x1]
    %v1214 = vlaneseq
    %v1215 = vshrl.u32 %v1214, 7
    %v1216 = vsub.s32 0, %v1215
    %v1217 = vrot.slane %v1212, %v1216
    %v1235 = vunpack.c.l.b16 %v1196
    %v1236 = vunpack.c.l.b16 %v1197
    %v1237 = vunpack.c.l.b16 %v1198
    %v1238 = vunpack.c.l.b16 %v1199
    %v1239 = vunpack.c.l.b16 %v1200
    %v1240 = vunpack.c.l.b16 %v1201
    %v1241 = vunpack.c.l.b16 %v1202
    %v1242 = vunpack.c.l.b16 %v1203
    %v1243 = vunpack.c.l.b16 %v1204
    %v1244 = vunpack.c.l.b16 %v1205
    %v1245 = vunpack.c.l.b16 %v1206
    %v1246 = vunpack.c.l.b16 %v1207
    %v1247 = vunpack.c.l.b16 %v1208
    %v1248 = vunpack.c.l.b16 %v1209
    %v1249 = vunpack.c.l.b16 %v1210
    %v1250 = vunpack.c.l.b16 %v1211
    %v1251 = vpack.c.b16 %v1236, %v1235
    %v1252 = vpack.c.b16 %v1238, %v1237
    %v1253 = vpack.c.b16 %v1240, %v1239
    %v1254 = vpack.c.b16 %v1242, %v1241
    %v1255 = vpack.c.b16 %v1244, %v1243
    %v1256 = vpack.c.b16 %v1246, %v1245
    %v1257 = vpack.c.b16 %v1248, %v1247
    %v1258 = vpack.c.b16 %v1250, %v1249
    %1267 = vmatprep.subr.bf16.mxu0 0
    %1268 = vmatpush1.bf16.msra.mxu0 %v1258
    %1269 = vmatprep.subr.bf16.mxu0 0
    %1270 = vmatpush1.bf16.msra.mxu0 %v1257
    %1271 = vmatprep.subr.bf16.mxu0 0
    %1272 = vmatpush1.bf16.msra.mxu0 %v1256
    %1273 = vmatprep.subr.bf16.mxu0 0
    %1274 = vmatpush1.bf16.msra.mxu0 %v1255
    %1275 = vmatprep.subr.bf16.mxu0 0
    %1276 = vmatpush1.bf16.msra.mxu0 %v1254
    %1277 = vmatprep.subr.bf16.mxu0 0
    %1278 = vmatpush1.bf16.msra.mxu0 %v1253
    %1279 = vmatprep.subr.bf16.mxu0 0
    %1280 = vmatpush1.bf16.msra.mxu0 %v1252
    %1281 = vmatprep.subr.bf16.mxu0 0
    %1282 = vmatpush1.bf16.msra.mxu0 %v1251
    %1283 = vmatprep.subr.bf16.mxu0 0
    %1284 = vmatpush2.bf16.msra.mxu0 0
    %1285 = vmatprep.subr.bf16.mxu0 0
    %1286 = vmatpush2.bf16.msra.mxu0 0
    %1287 = vmatprep.subr.bf16.mxu0 0
    %1288 = vmatpush2.bf16.msra.mxu0 0
    %1289 = vmatprep.subr.bf16.mxu0 0
    %1290 = vmatpush2.bf16.msra.mxu0 0
    %1291 = vmatprep.subr.bf16.mxu0 0
    %1292 = vmatpush2.bf16.msra.mxu0 0
    %1293 = vmatprep.subr.bf16.mxu0 0
    %1294 = vmatpush2.bf16.msra.mxu0 0
    %1295 = vmatprep.subr.bf16.mxu0 0
    %1296 = vmatpush2.bf16.msra.mxu0 0
    %1297 = vmatprep.subr.bf16.mxu0 0
    %1298 = vmatpush2.bf16.msra.mxu0 0
    %1299 = vmatprep.mubr.bf16.mxu0 0
    %1300 = vmatmul.mubr.bf16.gmra.mxu0 %v1195
    %v1301 = vpop.f32.mrf.mxu0
    %v1302 = vadd.f32 %v1217, %v1301
    %v1303 = vpop.f32.mrf.mxu0
    %v1304 = vpop.f32.mrf.mxu0
    %v1305 = vpop.f32.mrf.mxu0
    %1306 = vdwg.mxu0
    %v1307 = vpack.c.bf16 %v1302, %v1302
    %1308 = vst [vmem:[#allocation13] sm:$0xf] %v1307
    // Predicated region
    $region70: #{tpu_custom_call.1} parent=1 // pred_check
      _
    $region71: #{tpu_custom_call.1} parent=1 // pred_check_branch
      %1310 = sbr.rel (0) target = $region73
    $region72: #{tpu_custom_call.1} parent=1 // pred_region
      %s1312 = ssub.s32 64, 64
      %1313 = vsyncadd [#allocation4], %s1312
      %s1315 = sshll.u32 [#allocation13], 4
      %s1316 = int_to_ptr.vmem [resolvable:$true] %s1315
      %1318 = dma.vmem_to_hbm [thread:$0]  %s1316, 64, %s11, [#allocation4]
    $region73: #{tpu_custom_call.1} parent=1 // pred_fallthru
      _
    // Predicated region
    $region74: #{tpu_custom_call.1} parent=1 // pred_check
      _
    $region75: #{tpu_custom_call.1} parent=1 // pred_check_branch
      %1320 = sbr.rel (0) target = $region77
    $region76: #{tpu_custom_call.1} parent=1 // pred_region
      %1321 = dma.done [#allocation4], 64
    $region77: #{tpu_custom_call.1} parent=1 // pred_fallthru
      _
    %1322 = vsyncpa [#allocation3], 1
    %1323 = vsyncpa [#allocation6], 1
    %1324 = vsyncpa [#allocation9], 1
    %1325 = vsyncpa [#allocation12], 1
    %1326 = vsyncpa [#allocation4], 1

</llo_original>
